<compile_context>
chip_gen: v5e
topology: v5e:2x2
jax: 0.10.0
libtpu: 0.0.40
codegen_flags: <defaults>
</compile_context>

<pallas_src>
from functools import partial

import numpy as np
import jax
import jax.numpy as jnp
from jax.experimental import pallas as pl
from jax.experimental.pallas import tpu as pltpu


# ----------------------------------------------------------------------------
# Primary kernel: BlockSpec-pipelined input, DMA-scatter outputs.
# ----------------------------------------------------------------------------
def _dma_shuffle_kernel(bn, qb, x_ref, o1_ref, o2_ref, sem):
    # x_ref : VMEM block (bn, 2, 2, qb, HW) of x viewed as (N, 2, 2, Q, HW)
    # o1/o2 : full HBM refs shaped (N, Q, 2, HW)  (memory_space=pl.ANY)
    # sem   : 4 DMA semaphores, one per in-flight output copy.
    n0 = pl.multiple_of(pl.program_id(0) * bn, bn)
    q0 = pl.multiple_of(pl.program_id(1) * qb, qb)

    copies = []
    for g in (0, 1):                                   # even/odd output position
        for h, o_ref in ((0, o1_ref), (1, o2_ref)):    # which output tensor
            cp = pltpu.make_async_copy(
                x_ref.at[:, g, h, :, :],                               # (bn, qb, HW) dense VMEM
                o_ref.at[pl.ds(n0, bn), pl.ds(q0, qb), g, :],          # strided HBM scatter
                sem.at[2 * g + h],
            )
            cp.start()
            copies.append(cp)
    # Wait before returning so the pipelined input buffer can be safely reused.
    for cp in copies:
        cp.wait()


def _pick_tiling(N, Q, HW, dsize):
    """Choose (batch block, #q blocks) for the primary kernel."""
    min_sub = 8 * max(1, 4 // dsize)          # sublane granularity: f32 8, bf16 16, int8 32
    per_n = 4 * Q * HW * dsize                # input block bytes for bn=1, qb=Q  (= C*HW*dsize)
    target = 2 * 1024 * 1024                  # ~2 MiB blocks: well into the HBM-roofline plateau
    cap = 6 * 1024 * 1024                     # <= 12 MiB double buffered (safe on v7x / v5e)

    bn = max(1, min(N, target // per_n))
    want_steps = min(N, 4)                    # keep a few steps so DMAs overlap / 2 TCs share
    bn = min(bn, max(1, N // want_steps))
    while N % bn:
        bn -= 1

    # Optional q split: respects the VMEM cap and adds steps at tiny batch sizes,
    # but only when the resulting block stays sublane-aligned.
    nq = 1
    q_divs = [d for d in range(2, Q + 1) if Q % d == 0 and (Q // d) % min_sub == 0]
    for d in q_divs:
        block = bn * 4 * (Q // nq) * HW * dsize
        if block <= cap and (N // bn) * nq >= 4:
            break
        nq = d
    # TODO(synk): if even the smallest aligned q block exceeds the cap (enormous
    # H*W), split the HW axis as well.
    return bn, nq


# ----------------------------------------------------------------------------
# Fallback kernel (previously validated all-BlockSpec version).
# ----------------------------------------------------------------------------
def _fallback_kernel(x_ref, o1_ref, o2_ref):
    # x_ref : (bn, C, HW);  o1/o2 : (bn, Q, 2*HW) (channel pair packed into lanes)
    q = o1_ref.shape[1]
    hw = x_ref.shape[-1]
    c2 = 2 * q
    o1_ref[:, :, :hw] = x_ref[:, 0:q, :]
    o1_ref[:, :, hw:] = x_ref[:, c2:c2 + q, :]
    o2_ref[:, :, :hw] = x_ref[:, q:c2, :]
    o2_ref[:, :, hw:] = x_ref[:, c2 + q:, :]


# ----------------------------------------------------------------------------
# Public factory (mirrors the PyTorch module's __init__ + forward).
# ----------------------------------------------------------------------------
def make_channel_shuffle(in_channels, groups=2):
    if groups != 2:
        # Same restriction as the reference PyTorch module.
        raise NotImplementedError("Only groups=2 is implemented.")
    if in_channels % 4 != 0:
        # TODO(synk): odd group_len (C % 4 != 0) needs a per-channel gather path.
        raise NotImplementedError("Only in_channels divisible by 4 is implemented.")

    group_len = in_channels // groups
    out_channels = (
        np.arange(in_channels).reshape(groups, group_len).transpose(1, 0).flatten()
    )
    fp_index1 = out_channels[:group_len].astype(np.int32)
    fp_index2 = out_channels[group_len:].astype(np.int32)

    mode = {"impl": None}  # one-time capability latch: "dma" or "blockspec"

    def _dma_impl(x):
        N, C, H, W = x.shape
        HW = H * W
        Q = C // 4
        dsize = np.dtype(x.dtype).itemsize
        bn, nq = _pick_tiling(N, Q, HW, dsize)
        qb = Q // nq

        x5 = x.reshape(N, 2, 2, Q, HW)  # free: contiguous view of NCHW

        grid_spec = pltpu.PrefetchScalarGridSpec(
            num_scalar_prefetch=0,
            grid=(N // bn, nq),
            in_specs=[
                pl.BlockSpec((bn, 2, 2, qb, HW), lambda n, qi: (n, 0, 0, qi, 0)),
            ],
            out_specs=[
                pl.BlockSpec(memory_space=pl.ANY),  # written by manual DMA only
                pl.BlockSpec(memory_space=pl.ANY),
            ],
            scratch_shapes=[pltpu.SemaphoreType.DMA((4,))],
        )
        out_shape = (
            jax.ShapeDtypeStruct((N, Q, 2, HW), x.dtype),
            jax.ShapeDtypeStruct((N, Q, 2, HW), x.dtype),
        )
        o1, o2 = pl.pallas_call(
            partial(_dma_shuffle_kernel, bn, qb),
            grid_spec=grid_spec,
            out_shape=out_shape,
            compiler_params=pltpu.CompilerParams(
                dimension_semantics=("parallel", "parallel"),
                vmem_limit_bytes=32 * 1024 * 1024,
            ),
            cost_estimate=pl.CostEstimate(
                flops=0,
                transcendentals=0,
                bytes_accessed=2 * N * C * HW * dsize,
            ),
        )(x5)
        # Free contiguous reshapes: (N, Q, 2, HW) -> (N, C//2, H, W).
        return o1.reshape(N, 2 * Q, H, W), o2.reshape(N, 2 * Q, H, W)

    def _blockspec_impl(x):
        N, C, H, W = x.shape
        HW = H * W
        Q = C // 4
        dsize = np.dtype(x.dtype).itemsize
        x3 = x.reshape(N, C, HW)

        per_n_bytes = 2 * C * HW * dsize
        budget = 12 * 1024 * 1024
        bn = max(1, min(N, budget // (2 * per_n_bytes)))
        while N % bn:
            bn -= 1
        if bn == N and N > 1:
            bn = N // 2
            while N % bn:
                bn -= 1

        grid_spec = pltpu.PrefetchScalarGridSpec(
            num_scalar_prefetch=0,
            grid=(N // bn,),
            in_specs=[pl.BlockSpec((bn, C, HW), lambda n: (n, 0, 0))],
            out_specs=[
                pl.BlockSpec((bn, Q, 2 * HW), lambda n: (n, 0, 0)),
                pl.BlockSpec((bn, Q, 2 * HW), lambda n: (n, 0, 0)),
            ],
        )
        out_shape = (
            jax.ShapeDtypeStruct((N, Q, 2 * HW), x.dtype),
            jax.ShapeDtypeStruct((N, Q, 2 * HW), x.dtype),
        )
        o1, o2 = pl.pallas_call(
            _fallback_kernel,
            grid_spec=grid_spec,
            out_shape=out_shape,
            compiler_params=pltpu.CompilerParams(
                dimension_semantics=("parallel",),
                vmem_limit_bytes=32 * 1024 * 1024,
            ),
            cost_estimate=pl.CostEstimate(
                flops=0,
                transcendentals=0,
                bytes_accessed=2 * N * C * HW * dsize,
            ),
        )(x3)
        return o1.reshape(N, 2 * Q, H, W), o2.reshape(N, 2 * Q, H, W)

    def channel_shuffle(x):
        assert x.shape[1] == in_channels
        if mode["impl"] == "dma":
            return _dma_impl(x)
        if mode["impl"] == "blockspec":
            return _blockspec_impl(x)
        # First call: probe the DMA-scatter path once (compile + run), then latch.
        try:
            out = _dma_impl(x)
            jax.block_until_ready(out)
            mode["impl"] = "dma"
            return out
        except Exception:  # toolchain without ANY-output manual DMA support
            mode["impl"] = "blockspec"
            return _blockspec_impl(x)

    return channel_shuffle, fp_index1, fp_index2


if __name__ == "__main__":
    key = jax.random.PRNGKey(0)
    k1, k2 = jax.random.split(key)

    def _check(k, N, C, H, W):
        x = jax.random.normal(k, (N, C, H, W), dtype=jnp.float32)
        shuffle, fp1, fp2 = make_channel_shuffle(C, groups=2)
        o1, o2 = shuffle(x)
        jax.block_until_ready((o1, o2))
        # Reference (pure JAX) check of the PyTorch index_select semantics.
        ref1 = x[:, fp1, :, :]
        ref2 = x[:, fp2, :, :]
        assert o1.shape == ref1.shape and o1.dtype == ref1.dtype
        assert o2.shape == ref2.shape and o2.dtype == ref2.dtype
        np.testing.assert_allclose(np.asarray(o1), np.asarray(ref1))
        np.testing.assert_allclose(np.asarray(o2), np.asarray(ref2))

    _check(k1, 2, 32, 16, 16)   # small, lane/sublane-aligned activation
    _check(k2, 2, 116, 7, 7)    # realistic unaligned ShuffleNetV2 shape (Q=29, HW=49)

    print("KERNEL_OK")
</pallas_src>

<mosaic_0001>
module attributes {stable_mosaic.version = 11 : i64} {
  func.func @_dma_shuffle_kernel(%arg0: i32, %arg1: i32, %arg2: memref<1x2x2x8x256xf32, #tpu.memory_space<vmem>>, %arg3: memref<2x8x2x256xf32, #tpu.memory_space<any>>, %arg4: memref<2x8x2x256xf32, #tpu.memory_space<any>>, %arg5: memref<4x!tpu.dma_semaphore, #tpu.memory_space<semaphore_mem>>) attributes {dimension_semantics = [#tpu.dimension_semantics<parallel>, #tpu.dimension_semantics<parallel>], iteration_bounds = array<i64: 2, 1>, scalar_prefetch = 0 : i64, scratch_operands = 1 : i64, tpu.core_type = #tpu.core_type<tc>, window_params = [{transform_indices = @transform_0, window_bounds = array<i64: 1, 2, 2, 8, 256>}, {}, {}]} {
    %c1_i32 = arith.constant 1 : i32
    %0 = arith.muli %arg0, %c1_i32 : i32
    %1 = tpu.assume_multiple %0, 1 : i32
    %c8_i32 = arith.constant 8 : i32
    %2 = arith.muli %arg1, %c8_i32 : i32
    %3 = tpu.assume_multiple %2, 8 : i32
    %c0_i32 = arith.constant 0 : i32
    %c0_i32_0 = arith.constant 0 : i32
    %c0_i32_1 = arith.constant 0 : i32
    %c0_i32_2 = arith.constant 0 : i32
    %c0_i32_3 = arith.constant 0 : i32
    %c0_i32_4 = arith.constant 0 : i32
    %c0_i32_5 = arith.constant 0 : i32
    %4 = tpu.memref_slice %arg2[%c0_i32_3, %c0_i32, %c0_i32_0, %c0_i32_4, %c0_i32_5] : memref<1x2x2x8x256xf32, #tpu.memory_space<vmem>> -> memref<1x1x1x8x256xf32, #tpu.memory_space<vmem>>
    %5 = tpu.memref_squeeze %4 : memref<1x1x1x8x256xf32, #tpu.memory_space<vmem>> -> memref<1x8x256xf32, #tpu.memory_space<vmem>>
    %c0_i32_6 = arith.constant 0 : i32
    %6 = tpu.memref_slice %arg3[%1, %3, %c0_i32_1, %c0_i32_6] : memref<2x8x2x256xf32, #tpu.memory_space<any>> -> memref<1x8x1x256xf32, #tpu.memory_space<any>>
    %7 = tpu.memref_squeeze %6 : memref<1x8x1x256xf32, #tpu.memory_space<any>> -> memref<1x8x256xf32, #tpu.memory_space<any>>
    %8 = tpu.memref_slice %arg5[%c0_i32_2] : memref<4x!tpu.dma_semaphore, #tpu.memory_space<semaphore_mem>> -> memref<1x!tpu.dma_semaphore, #tpu.memory_space<semaphore_mem>>
    %9 = tpu.memref_squeeze %8 : memref<1x!tpu.dma_semaphore, #tpu.memory_space<semaphore_mem>> -> memref<!tpu.dma_semaphore, #tpu.memory_space<semaphore_mem>>
    tpu.enqueue_dma source(%5 : memref<1x8x256xf32, #tpu.memory_space<vmem>>) target(%7 : memref<1x8x256xf32, #tpu.memory_space<any>>) target_semaphore(%9 : memref<!tpu.dma_semaphore, #tpu.memory_space<semaphore_mem>>)
    %c0_i32_7 = arith.constant 0 : i32
    %c1_i32_8 = arith.constant 1 : i32
    %c0_i32_9 = arith.constant 0 : i32
    %c1_i32_10 = arith.constant 1 : i32
    %c0_i32_11 = arith.constant 0 : i32
    %c0_i32_12 = arith.constant 0 : i32
    %c0_i32_13 = arith.constant 0 : i32
    %10 = tpu.memref_slice %arg2[%c0_i32_11, %c0_i32_7, %c1_i32_8, %c0_i32_12, %c0_i32_13] : memref<1x2x2x8x256xf32, #tpu.memory_space<vmem>> -> memref<1x1x1x8x256xf32, #tpu.memory_space<vmem>>
    %11 = tpu.memref_squeeze %10 : memref<1x1x1x8x256xf32, #tpu.memory_space<vmem>> -> memref<1x8x256xf32, #tpu.memory_space<vmem>>
    %c0_i32_14 = arith.constant 0 : i32
    %12 = tpu.memref_slice %arg4[%1, %3, %c0_i32_9, %c0_i32_14] : memref<2x8x2x256xf32, #tpu.memory_space<any>> -> memref<1x8x1x256xf32, #tpu.memory_space<any>>
    %13 = tpu.memref_squeeze %12 : memref<1x8x1x256xf32, #tpu.memory_space<any>> -> memref<1x8x256xf32, #tpu.memory_space<any>>
    %14 = tpu.memref_slice %arg5[%c1_i32_10] : memref<4x!tpu.dma_semaphore, #tpu.memory_space<semaphore_mem>> -> memref<1x!tpu.dma_semaphore, #tpu.memory_space<semaphore_mem>>
    %15 = tpu.memref_squeeze %14 : memref<1x!tpu.dma_semaphore, #tpu.memory_space<semaphore_mem>> -> memref<!tpu.dma_semaphore, #tpu.memory_space<semaphore_mem>>
    tpu.enqueue_dma source(%11 : memref<1x8x256xf32, #tpu.memory_space<vmem>>) target(%13 : memref<1x8x256xf32, #tpu.memory_space<any>>) target_semaphore(%15 : memref<!tpu.dma_semaphore, #tpu.memory_space<semaphore_mem>>)
    %c1_i32_15 = arith.constant 1 : i32
    %c0_i32_16 = arith.constant 0 : i32
    %c1_i32_17 = arith.constant 1 : i32
    %c2_i32 = arith.constant 2 : i32
    %c0_i32_18 = arith.constant 0 : i32
    %c0_i32_19 = arith.constant 0 : i32
    %c0_i32_20 = arith.constant 0 : i32
    %16 = tpu.memref_slice %arg2[%c0_i32_18, %c1_i32_15, %c0_i32_16, %c0_i32_19, %c0_i32_20] : memref<1x2x2x8x256xf32, #tpu.memory_space<vmem>> -> memref<1x1x1x8x256xf32, #tpu.memory_space<vmem>>
    %17 = tpu.memref_squeeze %16 : memref<1x1x1x8x256xf32, #tpu.memory_space<vmem>> -> memref<1x8x256xf32, #tpu.memory_space<vmem>>
    %c0_i32_21 = arith.constant 0 : i32
    %18 = tpu.memref_slice %arg3[%1, %3, %c1_i32_17, %c0_i32_21] : memref<2x8x2x256xf32, #tpu.memory_space<any>> -> memref<1x8x1x256xf32, #tpu.memory_space<any>>
    %19 = tpu.memref_squeeze %18 : memref<1x8x1x256xf32, #tpu.memory_space<any>> -> memref<1x8x256xf32, #tpu.memory_space<any>>
    %20 = tpu.memref_slice %arg5[%c2_i32] : memref<4x!tpu.dma_semaphore, #tpu.memory_space<semaphore_mem>> -> memref<1x!tpu.dma_semaphore, #tpu.memory_space<semaphore_mem>>
    %21 = tpu.memref_squeeze %20 : memref<1x!tpu.dma_semaphore, #tpu.memory_space<semaphore_mem>> -> memref<!tpu.dma_semaphore, #tpu.memory_space<semaphore_mem>>
    tpu.enqueue_dma source(%17 : memref<1x8x256xf32, #tpu.memory_space<vmem>>) target(%19 : memref<1x8x256xf32, #tpu.memory_space<any>>) target_semaphore(%21 : memref<!tpu.dma_semaphore, #tpu.memory_space<semaphore_mem>>)
    %c1_i32_22 = arith.constant 1 : i32
    %c1_i32_23 = arith.constant 1 : i32
    %c1_i32_24 = arith.constant 1 : i32
    %c3_i32 = arith.constant 3 : i32
    %c0_i32_25 = arith.constant 0 : i32
    %c0_i32_26 = arith.constant 0 : i32
    %c0_i32_27 = arith.constant 0 : i32
    %22 = tpu.memref_slice %arg2[%c0_i32_25, %c1_i32_22, %c1_i32_23, %c0_i32_26, %c0_i32_27] : memref<1x2x2x8x256xf32, #tpu.memory_space<vmem>> -> memref<1x1x1x8x256xf32, #tpu.memory_space<vmem>>
    %23 = tpu.memref_squeeze %22 : memref<1x1x1x8x256xf32, #tpu.memory_space<vmem>> -> memref<1x8x256xf32, #tpu.memory_space<vmem>>
    %c0_i32_28 = arith.constant 0 : i32
    %24 = tpu.memref_slice %arg4[%1, %3, %c1_i32_24, %c0_i32_28] : memref<2x8x2x256xf32, #tpu.memory_space<any>> -> memref<1x8x1x256xf32, #tpu.memory_space<any>>
    %25 = tpu.memref_squeeze %24 : memref<1x8x1x256xf32, #tpu.memory_space<any>> -> memref<1x8x256xf32, #tpu.memory_space<any>>
    %26 = tpu.memref_slice %arg5[%c3_i32] : memref<4x!tpu.dma_semaphore, #tpu.memory_space<semaphore_mem>> -> memref<1x!tpu.dma_semaphore, #tpu.memory_space<semaphore_mem>>
    %27 = tpu.memref_squeeze %26 : memref<1x!tpu.dma_semaphore, #tpu.memory_space<semaphore_mem>> -> memref<!tpu.dma_semaphore, #tpu.memory_space<semaphore_mem>>
    tpu.enqueue_dma source(%23 : memref<1x8x256xf32, #tpu.memory_space<vmem>>) target(%25 : memref<1x8x256xf32, #tpu.memory_space<any>>) target_semaphore(%27 : memref<!tpu.dma_semaphore, #tpu.memory_space<semaphore_mem>>)
    %c0_i32_29 = arith.constant 0 : i32
    %c0_i32_30 = arith.constant 0 : i32
    %c0_i32_31 = arith.constant 0 : i32
    %c0_i32_32 = arith.constant 0 : i32
    %c0_i32_33 = arith.constant 0 : i32
    %c0_i32_34 = arith.constant 0 : i32
    %c0_i32_35 = arith.constant 0 : i32
    %28 = tpu.memref_slice %arg2[%c0_i32_33, %c0_i32_29, %c0_i32_30, %c0_i32_34, %c0_i32_35] : memref<1x2x2x8x256xf32, #tpu.memory_space<vmem>> -> memref<1x1x1x8x256xf32, #tpu.memory_space<vmem>>
    %29 = tpu.memref_squeeze %28 : memref<1x1x1x8x256xf32, #tpu.memory_space<vmem>> -> memref<1x8x256xf32, #tpu.memory_space<vmem>>
    %c0_i32_36 = arith.constant 0 : i32
    %30 = tpu.memref_slice %arg3[%1, %3, %c0_i32_31, %c0_i32_36] : memref<2x8x2x256xf32, #tpu.memory_space<any>> -> memref<1x8x1x256xf32, #tpu.memory_space<any>>
    %31 = tpu.memref_squeeze %30 : memref<1x8x1x256xf32, #tpu.memory_space<any>> -> memref<1x8x256xf32, #tpu.memory_space<any>>
    %32 = tpu.memref_slice %arg5[%c0_i32_32] : memref<4x!tpu.dma_semaphore, #tpu.memory_space<semaphore_mem>> -> memref<1x!tpu.dma_semaphore, #tpu.memory_space<semaphore_mem>>
    %33 = tpu.memref_squeeze %32 : memref<1x!tpu.dma_semaphore, #tpu.memory_space<semaphore_mem>> -> memref<!tpu.dma_semaphore, #tpu.memory_space<semaphore_mem>>
    tpu.wait_dma2 semaphore(%33 : memref<!tpu.dma_semaphore, #tpu.memory_space<semaphore_mem>>) src(%29 : memref<1x8x256xf32, #tpu.memory_space<vmem>>) dst(%31 : memref<1x8x256xf32, #tpu.memory_space<any>>)
    %c0_i32_37 = arith.constant 0 : i32
    %c1_i32_38 = arith.constant 1 : i32
    %c0_i32_39 = arith.constant 0 : i32
    %c1_i32_40 = arith.constant 1 : i32
    %c0_i32_41 = arith.constant 0 : i32
    %c0_i32_42 = arith.constant 0 : i32
    %c0_i32_43 = arith.constant 0 : i32
    %34 = tpu.memref_slice %arg2[%c0_i32_41, %c0_i32_37, %c1_i32_38, %c0_i32_42, %c0_i32_43] : memref<1x2x2x8x256xf32, #tpu.memory_space<vmem>> -> memref<1x1x1x8x256xf32, #tpu.memory_space<vmem>>
    %35 = tpu.memref_squeeze %34 : memref<1x1x1x8x256xf32, #tpu.memory_space<vmem>> -> memref<1x8x256xf32, #tpu.memory_space<vmem>>
    %c0_i32_44 = arith.constant 0 : i32
    %36 = tpu.memref_slice %arg4[%1, %3, %c0_i32_39, %c0_i32_44] : memref<2x8x2x256xf32, #tpu.memory_space<any>> -> memref<1x8x1x256xf32, #tpu.memory_space<any>>
    %37 = tpu.memref_squeeze %36 : memref<1x8x1x256xf32, #tpu.memory_space<any>> -> memref<1x8x256xf32, #tpu.memory_space<any>>
    %38 = tpu.memref_slice %arg5[%c1_i32_40] : memref<4x!tpu.dma_semaphore, #tpu.memory_space<semaphore_mem>> -> memref<1x!tpu.dma_semaphore, #tpu.memory_space<semaphore_mem>>
    %39 = tpu.memref_squeeze %38 : memref<1x!tpu.dma_semaphore, #tpu.memory_space<semaphore_mem>> -> memref<!tpu.dma_semaphore, #tpu.memory_space<semaphore_mem>>
    tpu.wait_dma2 semaphore(%39 : memref<!tpu.dma_semaphore, #tpu.memory_space<semaphore_mem>>) src(%35 : memref<1x8x256xf32, #tpu.memory_space<vmem>>) dst(%37 : memref<1x8x256xf32, #tpu.memory_space<any>>)
    %c1_i32_45 = arith.constant 1 : i32
    %c0_i32_46 = arith.constant 0 : i32
    %c1_i32_47 = arith.constant 1 : i32
    %c2_i32_48 = arith.constant 2 : i32
    %c0_i32_49 = arith.constant 0 : i32
    %c0_i32_50 = arith.constant 0 : i32
    %c0_i32_51 = arith.constant 0 : i32
    %40 = tpu.memref_slice %arg2[%c0_i32_49, %c1_i32_45, %c0_i32_46, %c0_i32_50, %c0_i32_51] : memref<1x2x2x8x256xf32, #tpu.memory_space<vmem>> -> memref<1x1x1x8x256xf32, #tpu.memory_space<vmem>>
    %41 = tpu.memref_squeeze %40 : memref<1x1x1x8x256xf32, #tpu.memory_space<vmem>> -> memref<1x8x256xf32, #tpu.memory_space<vmem>>
    %c0_i32_52 = arith.constant 0 : i32
    %42 = tpu.memref_slice %arg3[%1, %3, %c1_i32_47, %c0_i32_52] : memref<2x8x2x256xf32, #tpu.memory_space<any>> -> memref<1x8x1x256xf32, #tpu.memory_space<any>>
    %43 = tpu.memref_squeeze %42 : memref<1x8x1x256xf32, #tpu.memory_space<any>> -> memref<1x8x256xf32, #tpu.memory_space<any>>
    %44 = tpu.memref_slice %arg5[%c2_i32_48] : memref<4x!tpu.dma_semaphore, #tpu.memory_space<semaphore_mem>> -> memref<1x!tpu.dma_semaphore, #tpu.memory_space<semaphore_mem>>
    %45 = tpu.memref_squeeze %44 : memref<1x!tpu.dma_semaphore, #tpu.memory_space<semaphore_mem>> -> memref<!tpu.dma_semaphore, #tpu.memory_space<semaphore_mem>>
    tpu.wait_dma2 semaphore(%45 : memref<!tpu.dma_semaphore, #tpu.memory_space<semaphore_mem>>) src(%41 : memref<1x8x256xf32, #tpu.memory_space<vmem>>) dst(%43 : memref<1x8x256xf32, #tpu.memory_space<any>>)
    %c1_i32_53 = arith.constant 1 : i32
    %c1_i32_54 = arith.constant 1 : i32
    %c1_i32_55 = arith.constant 1 : i32
    %c3_i32_56 = arith.constant 3 : i32
    %c0_i32_57 = arith.constant 0 : i32
    %c0_i32_58 = arith.constant 0 : i32
    %c0_i32_59 = arith.constant 0 : i32
    %46 = tpu.memref_slice %arg2[%c0_i32_57, %c1_i32_53, %c1_i32_54, %c0_i32_58, %c0_i32_59] : memref<1x2x2x8x256xf32, #tpu.memory_space<vmem>> -> memref<1x1x1x8x256xf32, #tpu.memory_space<vmem>>
    %47 = tpu.memref_squeeze %46 : memref<1x1x1x8x256xf32, #tpu.memory_space<vmem>> -> memref<1x8x256xf32, #tpu.memory_space<vmem>>
    %c0_i32_60 = arith.constant 0 : i32
    %48 = tpu.memref_slice %arg4[%1, %3, %c1_i32_55, %c0_i32_60] : memref<2x8x2x256xf32, #tpu.memory_space<any>> -> memref<1x8x1x256xf32, #tpu.memory_space<any>>
    %49 = tpu.memref_squeeze %48 : memref<1x8x1x256xf32, #tpu.memory_space<any>> -> memref<1x8x256xf32, #tpu.memory_space<any>>
    %50 = tpu.memref_slice %arg5[%c3_i32_56] : memref<4x!tpu.dma_semaphore, #tpu.memory_space<semaphore_mem>> -> memref<1x!tpu.dma_semaphore, #tpu.memory_space<semaphore_mem>>
    %51 = tpu.memref_squeeze %50 : memref<1x!tpu.dma_semaphore, #tpu.memory_space<semaphore_mem>> -> memref<!tpu.dma_semaphore, #tpu.memory_space<semaphore_mem>>
    tpu.wait_dma2 semaphore(%51 : memref<!tpu.dma_semaphore, #tpu.memory_space<semaphore_mem>>) src(%47 : memref<1x8x256xf32, #tpu.memory_space<vmem>>) dst(%49 : memref<1x8x256xf32, #tpu.memory_space<any>>)
    return
  }
  func.func @transform_0(%arg0: i32, %arg1: i32) -> (i32, i32, i32, i32, i32) {
    %c0_i32 = arith.constant 0 : i32
    %c0_i32_0 = arith.constant 0 : i32
    %c0_i32_1 = arith.constant 0 : i32
    %c0_i32_2 = arith.constant 0 : i32
    return %arg0, %c0_i32, %c0_i32_0, %arg1, %c0_i32_1 : i32, i32, i32, i32, i32
  }
}

module attributes {stable_mosaic.version = 11 : i64} {
  func.func @_fallback_kernel(%arg0: i32, %arg1: memref<1x32x256xf32, #tpu.memory_space<vmem>>, %arg2: memref<1x8x512xf32, #tpu.memory_space<vmem>>, %arg3: memref<1x8x512xf32, #tpu.memory_space<vmem>>) attributes {dimension_semantics = [#tpu.dimension_semantics<parallel>], iteration_bounds = array<i64: 2>, scalar_prefetch = 0 : i64, scratch_operands = 0 : i64, tpu.core_type = #tpu.core_type<tc>, window_params = [{transform_indices = @transform_0, window_bounds = array<i64: 1, 32, 256>}, {transform_indices = @transform_1, window_bounds = array<i64: 1, 8, 512>}, {transform_indices = @transform_2, window_bounds = array<i64: 1, 8, 512>}]} {
    %c0 = arith.constant 0 : index
    %c0_0 = arith.constant 0 : index
    %c0_1 = arith.constant 0 : index
    %0 = vector.load %arg1[%c0, %c0_0, %c0_1] : memref<1x32x256xf32, #tpu.memory_space<vmem>>, vector<1x8x256xf32>
    %c0_2 = arith.constant 0 : index
    %c0_3 = arith.constant 0 : index
    %c0_4 = arith.constant 0 : index
    %1 = vector.load %arg2[%c0_2, %c0_3, %c0_4] : memref<1x8x512xf32, #tpu.memory_space<vmem>>, vector<1x8x256xf32>
    tpu.vector_store %arg2[%c0_2, %c0_3, %c0_4], %0 {strides = array<i32>} : memref<1x8x512xf32, #tpu.memory_space<vmem>>, vector<1x8x256xf32>,
    %c0_5 = arith.constant 0 : index
    %c16 = arith.constant 16 : index
    %c0_6 = arith.constant 0 : index
    %2 = vector.load %arg1[%c0_5, %c16, %c0_6] : memref<1x32x256xf32, #tpu.memory_space<vmem>>, vector<1x8x256xf32>
    %c0_7 = arith.constant 0 : index
    %c0_8 = arith.constant 0 : index
    %c256 = arith.constant 256 : index
    %3 = vector.load %arg2[%c0_7, %c0_8, %c256] : memref<1x8x512xf32, #tpu.memory_space<vmem>>, vector<1x8x256xf32>
    tpu.vector_store %arg2[%c0_7, %c0_8, %c256], %2 {strides = array<i32>} : memref<1x8x512xf32, #tpu.memory_space<vmem>>, vector<1x8x256xf32>,
    %c0_9 = arith.constant 0 : index
    %c8 = arith.constant 8 : index
    %c0_10 = arith.constant 0 : index
    %4 = vector.load %arg1[%c0_9, %c8, %c0_10] : memref<1x32x256xf32, #tpu.memory_space<vmem>>, vector<1x8x256xf32>
    %c0_11 = arith.constant 0 : index
    %c0_12 = arith.constant 0 : index
    %c0_13 = arith.constant 0 : index
    %5 = vector.load %arg3[%c0_11, %c0_12, %c0_13] : memref<1x8x512xf32, #tpu.memory_space<vmem>>, vector<1x8x256xf32>
    tpu.vector_store %arg3[%c0_11, %c0_12, %c0_13], %4 {strides = array<i32>} : memref<1x8x512xf32, #tpu.memory_space<vmem>>, vector<1x8x256xf32>,
    %c0_14 = arith.constant 0 : index
    %c24 = arith.constant 24 : index
    %c0_15 = arith.constant 0 : index
    %6 = vector.load %arg1[%c0_14, %c24, %c0_15] : memref<1x32x256xf32, #tpu.memory_space<vmem>>, vector<1x8x256xf32>
    %c0_16 = arith.constant 0 : index
    %c0_17 = arith.constant 0 : index
    %c256_18 = arith.constant 256 : index
    %7 = vector.load %arg3[%c0_16, %c0_17, %c256_18] : memref<1x8x512xf32, #tpu.memory_space<vmem>>, vector<1x8x256xf32>
    tpu.vector_store %arg3[%c0_16, %c0_17, %c256_18], %6 {strides = array<i32>} : memref<1x8x512xf32, #tpu.memory_space<vmem>>, vector<1x8x256xf32>,
    return
  }
  func.func @transform_0(%arg0: i32) -> (i32, i32, i32) {
    %c0_i32 = arith.constant 0 : i32
    %c0_i32_0 = arith.constant 0 : i32
    %c0_i32_1 = arith.constant 0 : i32
    return %arg0, %c0_i32, %c0_i32_0 : i32, i32, i32
  }
  func.func @transform_1(%arg0: i32) -> (i32, i32, i32) {
    %c0_i32 = arith.constant 0 : i32
    %c0_i32_0 = arith.constant 0 : i32
    %c0_i32_1 = arith.constant 0 : i32
    return %arg0, %c0_i32, %c0_i32_0 : i32, i32, i32
  }
  func.func @transform_2(%arg0: i32) -> (i32, i32, i32) {
    %c0_i32 = arith.constant 0 : i32
    %c0_i32_0 = arith.constant 0 : i32
    %c0_i32_1 = arith.constant 0 : i32
    return %arg0, %c0_i32, %c0_i32_0 : i32, i32, i32
  }
}

</mosaic_0001>

<llo_original>
// kernel: tpu_custom_call.1
$region0: #{tpu_custom_call.1}
  #allocation0 [shape = 'u32[]', space=smem, size = 0x4, offset = 0x4, fixed_abs, tag = 'smem constant byte address 0x4 - core index']
  #allocation1 [shape = 'u32[72,128]{1,0:T(1,128)}', space=vmem, size = 0x9000, scoped, tag = 'internal scratch']
  #allocation2 [shape = 's32[4]{0}', space=sflag, size = 0x10, scoped, tag = 'scratch operand']
  #allocation5 [shape = 's32[]', space=sflag, size = 0x4, offset = 0, fixed_abs, tag = 'sflag constant byte address 0x0 - dummy sync flag']
  #allocation7 [shape = 's32[]', space=sflag, size = 0x4, offset = 0, fixed_abs, tag = 'sflag constant byte address 0x0 - dummy sync flag']
  #allocation9 [shape = 's32[]', space=sflag, size = 0x4, offset = 0, fixed_abs, tag = 'sflag constant byte address 0x0 - dummy sync flag']
  #allocation11 [shape = 's32[]', space=sflag, size = 0x4, offset = 0, fixed_abs, tag = 'sflag constant byte address 0x0 - dummy sync flag']
  %s0 = inlined_call_operand.hbm [shape: f32[2,2,2,8,256], index: 0, kind: input, shape index: {}]
  %s1 = inlined_call_operand.hbm [shape: f32[2,8,2,256], index: 1, kind: output, shape index: {0}]
  %s2 = inlined_call_operand.hbm [shape: f32[2,8,2,256], index: 2, kind: output, shape index: {1}]
  %3 = xla_tuple %s1, %s2
  %s4 = sld [smem:[#allocation0]]
  $region29: #{tpu_custom_call.1} parent=0
    _
  %s6 = ssub.s32 1, %s4
  %s7 = scalar_select 0, %s6, %s4
  $region1: #{tpu_custom_call.1} parent=0
    #allocation3 [shape = 'u8[65536]{0}', space=vmem, size = 0x10000, scoped, tag = 'input window, operand 0']
    #allocation4 [shape = 's32[2]{0}', space=sflag, size = 0x8, scoped, tag = 'scoped memory for tpu_custom_call.1']
    %8 = vsyncpa [#allocation4], 0
    %s9 = scalar_lea.sflag [#allocation4], 1
    %10 = vsyncpa %s9, 0
    loop: start=0, step=1, limit=3
    $region2: #{tpu_custom_call.1} parent=1 // loop_pre_header
      _
    $region3: #{tpu_custom_call.1} parent=1 // loop_header
      %s12 = sphi 0, %s16
      %p13 = scmp.ge.s32.totalorder %s12, 3
      %s18 = sphi 0, %s28
      %s19 = sphi 0, %s24
      %s20 = sphi 0, %s18
      %s21 = sphi 0, %s19
      %s33 = sphi 0, %s35
      %s36 = sphi 0, %s33
      %s46 = sphi 0, %s36
    $region4: #{tpu_custom_call.1} parent=1 // loop_header_branch
      %15 = sbr.rel (%p13) target = $region8
    $region5: #{tpu_custom_call.1} parent=1 // loop_body
      %s17 = ssub.s32 %s12, 1
      %s22 = sadd.s32 1, %s19
      %p23 = scmp.ge.s32.totalorder %s22, 1
      %s24 = scalar_select %p23, 0, %s22
      %s25 = sadd.s32 1, %s18
      %s26 = scalar_select %p23, %s25, %s18
      %p27 = scmp.ge.s32.totalorder %s26, 2
      %s28 = scalar_select %p27, 0, %s26
      %s29 = ssub.s32 %s18, %s28
      %s30 = ssub.s32 %s19, %s24
      %s31 = sor.u32 %s29, %s30
      %p32 = scmp.eq.s32.totalorder %s31, 0
      %s34 = sadd.s32 %s33, 1
      %s35 = scalar_select %p32, %s33, %s34
      %p37 = pneg %p32
      %p38 = scmp.eq.s32.totalorder %s12, 1
      %p39 = por %p37, %p38
      %p40 = scmp.ne.s32.totalorder %s33, %s36
      %p41 = scmp.eq.s32.totalorder %s12, 0
      %p42 = por %p40, %p41
      %p43 = scmp.ne.s32.totalorder %s33, %s36
      %p44 = scmp.eq.s32.totalorder %s17, 1
      %p45 = por %p43, %p44
      %p47 = scmp.ne.s32.totalorder %s36, %s46
      %p48 = scmp.eq.s32.totalorder %s17, 0
      %p49 = por %p47, %p48
      %p50 = scmp.le.s32.totalorder 1, %s12
      // Predicated region
      $region9: #{tpu_custom_call.1} parent=5 // pred_check
        %p51 = pneg %p50
      $region10: #{tpu_custom_call.1} parent=5 // pred_check_branch
        %53 = sbr.rel (%p51) target = $region12
      $region11: #{tpu_custom_call.1} parent=5 // pred_region
        %s54 = ssub.s32 %s12, 1
      $region12: #{tpu_custom_call.1} parent=5 // pred_fallthru
        _
      %p55 = scmp.lt.s32.totalorder %s12, 2
      // Predicated region
      $region13: #{tpu_custom_call.1} parent=5 // pred_check
        %p56 = pneg %p55
      $region14: #{tpu_custom_call.1} parent=5 // pred_check_branch
        %58 = sbr.rel (%p56) target = $region16
      $region15: #{tpu_custom_call.1} parent=5 // pred_region
        // Predicated region
        $region17: #{tpu_custom_call.1} parent=15 // pred_check
          %p59 = pneg %p42
        $region18: #{tpu_custom_call.1} parent=15 // pred_check_branch
          %61 = sbr.rel (%p59) target = $region20
        $region19: #{tpu_custom_call.1} parent=15 // pred_region
          %s62 = sand.u32 %s33, 1
          %s63 = scalar_lea.sflag [#allocation4], %s62
          %s64 = sand.u32 %s33, 1
          %s65 = smul.addr %s64, 64
          %s66 = scalar_lea.vmem [#allocation3], %s65
          %68 = vsyncadd %s63, 0
          %s69 = smul.addr %s19, 2
          %s70 = smul.addr %s18, 8
          %s71 = sadd.s32 %s69, %s70
          %s72 = smul.addr %s71, 8
          %s73 = scalar_lea.hbm %s0, %s72
          %s74 = sshll.u32 %s73, 4
          %s75 = int_to_ptr.hbm [resolvable:$true] %s74
          %s76 = sshll.u32 %s66, 4
          %s77 = int_to_ptr.vmem [resolvable:$true] %s76
          %82 = dma.hbm_to_vmem [thread:$0]  %s75, 1024, %s77, %s63, 256, 256, 16
        $region20: #{tpu_custom_call.1} parent=15 // pred_fallthru
          _
      $region16: #{tpu_custom_call.1} parent=5 // pred_fallthru
        _
      %p83 = scmp.le.s32.totalorder 1, %s12
      // Predicated region
      $region21: #{tpu_custom_call.1} parent=5 // pred_check
        %p84 = pneg %p83
      $region22: #{tpu_custom_call.1} parent=5 // pred_check_branch
        %86 = sbr.rel (%p84) target = $region24
      $region23: #{tpu_custom_call.1} parent=5 // pred_region
        #allocation6 [shape = 'u32[6]{0}', space=smem, size = 0x18, scoped, tag = 'DMA stride descriptor']
        #allocation8 [shape = 'u32[6]{0}', space=smem, size = 0x18, scoped, tag = 'DMA stride descriptor']
        #allocation10 [shape = 'u32[6]{0}', space=smem, size = 0x18, scoped, tag = 'DMA stride descriptor']
        #allocation12 [shape = 'u32[6]{0}', space=smem, size = 0x18, scoped, tag = 'DMA stride descriptor']
        %s87 = ssub.s32 %s12, 1
        %s88 = sand.u32 %s36, 1
        %s89 = scalar_lea.sflag [#allocation4], %s88
        %s90 = sand.u32 %s36, 1
        %s91 = smul.addr %s90, 64
        %s92 = scalar_lea.vmem [#allocation3], %s91
        // Predicated region
        $region25: #{tpu_custom_call.1} parent=23 // pred_check
          %p93 = pneg %p49
        $region26: #{tpu_custom_call.1} parent=23 // pred_check_branch
          %95 = sbr.rel (%p93) target = $region28
        $region27: #{tpu_custom_call.1} parent=23 // pred_region
          %97 = dma.done %s89, 1024
        $region28: #{tpu_custom_call.1} parent=23 // pred_fallthru
          _
        %s98 = sand.u32 %s36, 1
        %s99 = scalar_lea.sflag [#allocation4], %s98
        %s100 = sand.u32 %s36, 1
        %s101 = smul.addr %s100, 64
        %s102 = scalar_lea.vmem [#allocation3], %s101
        %p103 = pneg %p49
        %p104 = pneg %p45
        %s105 = smul.u32 %s21, 8
        %s106 = smul.u32 %s105, 4
        %s107 = smul.u32 %s20, 32
        %s108 = sadd.s32 %s106, %s107
        %s109 = scalar_lea.hbm %s1, %s108
        %s111 = sshll.u32 1, 14
        %s112 = sxor.u32 4294967295, %s111
        %s115 = sshll.u32 7, 18
        %s116 = sxor.u32 4294967295, %s115
        %s117 = sand.u32 0, %s116
        %s119 = sor.u32 %s117, 0
        %s120 = sshll.u32 %s92, 4
        %s121 = int_to_ptr.vmem [resolvable:$true] %s120
        %s122 = sshll.u32 %s109, 4
        %s123 = int_to_ptr.hbm [resolvable:$true] %s122
        %129 = sst [smem:[#allocation6]] 128
        %s130 = scalar_lea.smem [#allocation6], 1
        %131 = sst [smem:[%s130]] 32
        %s132 = scalar_lea.smem [#allocation6], 2
        %133 = sst [smem:[%s132]] 8
        %s134 = scalar_lea.smem [#allocation6], 3
        %135 = sst [smem:[%s134]] 16
        %s136 = scalar_lea.smem [#allocation6], 4
        %137 = sst [smem:[%s136]] 64
        %s138 = scalar_lea.smem [#allocation6], 5
        %139 = sst [smem:[%s138]] 1
        %141 = dma.general %s121, 256, %s123, [#allocation2], [#allocation5], [#allocation6], %s119, 0
        %s142 = scalar_lea.vmem %s92, 16 [#allocation3]
        %s143 = scalar_lea.hbm %s2, %s108
        %s144 = scalar_lea.sflag [#allocation2], 1
        %s146 = sshll.u32 1, 14
        %s147 = sxor.u32 4294967295, %s146
        %s150 = sshll.u32 7, 18
        %s151 = sxor.u32 4294967295, %s150
        %s152 = sand.u32 0, %s151
        %s154 = sor.u32 %s152, 0
        %s155 = sshll.u32 %s142, 4
        %s156 = int_to_ptr.vmem [resolvable:$true] %s155
        %s157 = sshll.u32 %s143, 4
        %s158 = int_to_ptr.hbm [resolvable:$true] %s157
        %164 = sst [smem:[#allocation8]] 128
        %s165 = scalar_lea.smem [#allocation8], 1
        %166 = sst [smem:[%s165]] 32
        %s167 = scalar_lea.smem [#allocation8], 2
        %168 = sst [smem:[%s167]] 8
        %s169 = scalar_lea.smem [#allocation8], 3
        %170 = sst [smem:[%s169]] 16
        %s171 = scalar_lea.smem [#allocation8], 4
        %172 = sst [smem:[%s171]] 64
        %s173 = scalar_lea.smem [#allocation8], 5
        %174 = sst [smem:[%s173]] 1
        %176 = dma.general %s156, 256, %s158, %s144, [#allocation7], [#allocation8], %s154, 0
        %s177 = scalar_lea.vmem %s92, 32 [#allocation3]
        %s178 = sadd.s32 1, %s106
        %s179 = sadd.s32 %s178, %s107
        %s180 = scalar_lea.hbm %s1, %s179
        %s181 = scalar_lea.sflag [#allocation2], 2
        %s183 = sshll.u32 1, 14
        %s184 = sxor.u32 4294967295, %s183
        %s187 = sshll.u32 7, 18
        %s188 = sxor.u32 4294967295, %s187
        %s189 = sand.u32 0, %s188
        %s191 = sor.u32 %s189, 0
        %s192 = sshll.u32 %s177, 4
        %s193 = int_to_ptr.vmem [resolvable:$true] %s192
        %s194 = sshll.u32 %s180, 4
        %s195 = int_to_ptr.hbm [resolvable:$true] %s194
        %201 = sst [smem:[#allocation10]] 128
        %s202 = scalar_lea.smem [#allocation10], 1
        %203 = sst [smem:[%s202]] 32
        %s204 = scalar_lea.smem [#allocation10], 2
        %205 = sst [smem:[%s204]] 8
        %s206 = scalar_lea.smem [#allocation10], 3
        %207 = sst [smem:[%s206]] 16
        %s208 = scalar_lea.smem [#allocation10], 4
        %209 = sst [smem:[%s208]] 64
        %s210 = scalar_lea.smem [#allocation10], 5
        %211 = sst [smem:[%s210]] 1
        %213 = dma.general %s193, 256, %s195, %s181, [#allocation9], [#allocation10], %s191, 0
        %s214 = scalar_lea.vmem %s92, 48 [#allocation3]
        %s215 = scalar_lea.hbm %s2, %s179
        %s216 = scalar_lea.sflag [#allocation2], 3
        %s218 = sshll.u32 1, 14
        %s219 = sxor.u32 4294967295, %s218
        %s222 = sshll.u32 7, 18
        %s223 = sxor.u32 4294967295, %s222
        %s224 = sand.u32 0, %s223
        %s226 = sor.u32 %s224, 0
        %s227 = sshll.u32 %s214, 4
        %s228 = int_to_ptr.vmem [resolvable:$true] %s227
        %s229 = sshll.u32 %s215, 4
        %s230 = int_to_ptr.hbm [resolvable:$true] %s229
        %236 = sst [smem:[#allocation12]] 128
        %s237 = scalar_lea.smem [#allocation12], 1
        %238 = sst [smem:[%s237]] 32
        %s239 = scalar_lea.smem [#allocation12], 2
        %240 = sst [smem:[%s239]] 8
        %s241 = scalar_lea.smem [#allocation12], 3
        %242 = sst [smem:[%s241]] 16
        %s243 = scalar_lea.smem [#allocation12], 4
        %244 = sst [smem:[%s243]] 64
        %s245 = scalar_lea.smem [#allocation12], 5
        %246 = sst [smem:[%s245]] 1
        %248 = dma.general %s228, 256, %s230, %s216, [#allocation11], [#allocation12], %s226, 0
        %s249 = smul.u32 1, 8
        %s250 = smul.u32 %s249, 2
        %s251 = sshll.u32 %s250, 4
        %252 = dma.done [#allocation2], %s251
        %s253 = sshll.u32 %s250, 4
        %254 = dma.done %s144, %s253
        %s255 = sshll.u32 %s250, 4
        %256 = dma.done %s181, %s255
        %s257 = sshll.u32 %s250, 4
        %258 = dma.done %s216, %s257
      $region24: #{tpu_custom_call.1} parent=5 // pred_fallthru
        _
    $region6: #{tpu_custom_call.1} parent=1 // loop_footer
      %s16 = sadd.s32 1, %s12
    $region7: #{tpu_custom_call.1} parent=1 // loop_footer_branch
      %11 = sbr.rel target = $region3
    $region8: #{tpu_custom_call.1} parent=1 // loop_exit
      _
    %259 = vsyncpa [#allocation4], 1
    %s260 = scalar_lea.sflag [#allocation4], 1
    %261 = vsyncpa %s260, 1
  %262 = vsyncmov [#allocation2]
  %s263 = vpop.sfrf %262
  %p264 = scmp.eq.s32.totalorder %s263, 0
  %p265 = pneg %p264
  %267 = shalt.err (%p265)
  %s268 = scalar_lea.sflag [#allocation2], 1
  %269 = vsyncmov %s268
  %s270 = vpop.sfrf %269
  %p271 = scmp.eq.s32.totalorder %s270, 0
  %p272 = pneg %p271
  %274 = shalt.err (%p272)
  %s275 = scalar_lea.sflag [#allocation2], 2
  %276 = vsyncmov %s275
  %s277 = vpop.sfrf %276
  %p278 = scmp.eq.s32.totalorder %s277, 0
  %p279 = pneg %p278
  %281 = shalt.err (%p279)
  %s282 = scalar_lea.sflag [#allocation2], 3
  %283 = vsyncmov %s282
  %s284 = vpop.sfrf %283
  %p285 = scmp.eq.s32.totalorder %s284, 0
  %p286 = pneg %p285
  %288 = shalt.err (%p286)

// kernel: tpu_custom_call.1
$region0: #{tpu_custom_call.1}
  #allocation0 [shape = 'u32[]', space=smem, size = 0x4, offset = 0x4, fixed_abs, tag = 'smem constant byte address 0x4 - core index']
  #allocation1 [shape = 'u32[72,128]{1,0:T(1,128)}', space=vmem, size = 0x9000, scoped, tag = 'internal scratch']
  %s0 = inlined_call_operand.hbm [shape: f32[2,32,256], index: 0, kind: input, shape index: {}]
  %s1 = inlined_call_operand.hbm [shape: f32[2,8,512], index: 1, kind: output, shape index: {0}]
  %s2 = inlined_call_operand.hbm [shape: f32[2,8,512], index: 2, kind: output, shape index: {1}]
  %3 = xla_tuple %s1, %s2
  %s4 = sld [smem:[#allocation0]]
  $region49: #{tpu_custom_call.1} parent=0
    _
  %s6 = ssub.s32 1, %s4
  %s7 = scalar_select 0, %s6, %s4
  $region1: #{tpu_custom_call.1} parent=0
    #allocation2 [shape = 'u8[65536]{0}', space=vmem, size = 0x10000, scoped, tag = 'input window, operand 0']
    #allocation3 [shape = 's32[2]{0}', space=sflag, size = 0x8, scoped, tag = 'scoped memory for tpu_custom_call.1']
    #allocation4 [shape = 's32[2]{0}', space=sflag, size = 0x8, scoped, tag = 'scoped memory for tpu_custom_call.1']
    #allocation5 [shape = 'u8[32768]{0}', space=vmem, size = 0x8000, scoped, tag = 'output window, operand 0']
    #allocation6 [shape = 'u8[32768]{0}', space=vmem, size = 0x8000, scoped, tag = 'output window, operand 1']
    #allocation7 [shape = 's32[2]{0}', space=sflag, size = 0x8, scoped, tag = 'scoped memory for tpu_custom_call.1']
    %8 = vsyncpa [#allocation3], 0
    %s9 = scalar_lea.sflag [#allocation3], 1
    %10 = vsyncpa %s9, 0
    %11 = vsyncpa [#allocation4], 0
    %s12 = scalar_lea.sflag [#allocation4], 1
    %13 = vsyncpa %s12, 0
    %14 = vsyncpa [#allocation7], 0
    %s15 = scalar_lea.sflag [#allocation7], 1
    %16 = vsyncpa %s15, 0
    loop: start=0, step=1, limit=4
    $region2: #{tpu_custom_call.1} parent=1 // loop_pre_header
      _
    $region3: #{tpu_custom_call.1} parent=1 // loop_header
      %s18 = sphi 0, %s22
      %p19 = scmp.ge.s32.totalorder %s18, 4
      %s28 = sphi 0, %s30
      %s31 = sphi 0, %s28
      %s32 = sphi 0, %s31
      %s48 = sphi 0, %s32
      %s54 = sphi 0, %s56
      %s57 = sphi 0, %s54
      %s58 = sphi 0, %s57
      %s74 = sphi 0, %s58
      %s80 = sphi 0, %s82
      %s83 = sphi 0, %s80
      %s84 = sphi 0, %s83
      %s100 = sphi 0, %s84
    $region4: #{tpu_custom_call.1} parent=1 // loop_header_branch
      %21 = sbr.rel (%p19) target = $region8
    $region5: #{tpu_custom_call.1} parent=1 // loop_body
      %s23 = ssub.s32 %s18, 1
      %s24 = ssub.s32 %s18, 2
      %s25 = sadd.s32 %s18, 1
      %s26 = ssub.s32 %s18, %s25
      %p27 = scmp.eq.s32.totalorder %s26, 0
      %s29 = sadd.s32 %s28, 1
      %s30 = scalar_select %p27, %s28, %s29
      %p33 = pneg %p27
      %p34 = scmp.eq.s32.totalorder %s18, 1
      %p35 = por %p33, %p34
      %p36 = scmp.ne.s32.totalorder %s28, %s31
      %p37 = scmp.eq.s32.totalorder %s18, 0
      %p38 = por %p36, %p37
      %p39 = scmp.ne.s32.totalorder %s28, %s31
      %p40 = scmp.eq.s32.totalorder %s23, 1
      %p41 = por %p39, %p40
      %p42 = scmp.ne.s32.totalorder %s31, %s32
      %p43 = scmp.eq.s32.totalorder %s23, 0
      %p44 = por %p42, %p43
      %p45 = scmp.ne.s32.totalorder %s31, %s32
      %p46 = scmp.eq.s32.totalorder %s24, 1
      %p47 = por %p45, %p46
      %p49 = scmp.ne.s32.totalorder %s32, %s48
      %p50 = scmp.eq.s32.totalorder %s24, 0
      %p51 = por %p49, %p50
      %s52 = ssub.s32 %s18, %s25
      %p53 = scmp.eq.s32.totalorder %s52, 0
      %s55 = sadd.s32 %s54, 1
      %s56 = scalar_select %p53, %s54, %s55
      %p59 = pneg %p53
      %p60 = scmp.eq.s32.totalorder %s18, 1
      %p61 = por %p59, %p60
      %p62 = scmp.ne.s32.totalorder %s54, %s57
      %p63 = scmp.eq.s32.totalorder %s18, 0
      %p64 = por %p62, %p63
      %p65 = scmp.ne.s32.totalorder %s54, %s57
      %p66 = scmp.eq.s32.totalorder %s23, 1
      %p67 = por %p65, %p66
      %p68 = scmp.ne.s32.totalorder %s57, %s58
      %p69 = scmp.eq.s32.totalorder %s23, 0
      %p70 = por %p68, %p69
      %p71 = scmp.ne.s32.totalorder %s57, %s58
      %p72 = scmp.eq.s32.totalorder %s24, 1
      %p73 = por %p71, %p72
      %p75 = scmp.ne.s32.totalorder %s58, %s74
      %p76 = scmp.eq.s32.totalorder %s24, 0
      %p77 = por %p75, %p76
      %s78 = ssub.s32 %s18, %s25
      %p79 = scmp.eq.s32.totalorder %s78, 0
      %s81 = sadd.s32 %s80, 1
      %s82 = scalar_select %p79, %s80, %s81
      %p85 = pneg %p79
      %p86 = scmp.eq.s32.totalorder %s18, 1
      %p87 = por %p85, %p86
      %p88 = scmp.ne.s32.totalorder %s80, %s83
      %p89 = scmp.eq.s32.totalorder %s18, 0
      %p90 = por %p88, %p89
      %p91 = scmp.ne.s32.totalorder %s80, %s83
      %p92 = scmp.eq.s32.totalorder %s23, 1
      %p93 = por %p91, %p92
      %p94 = scmp.ne.s32.totalorder %s83, %s84
      %p95 = scmp.eq.s32.totalorder %s23, 0
      %p96 = por %p94, %p95
      %p97 = scmp.ne.s32.totalorder %s83, %s84
      %p98 = scmp.eq.s32.totalorder %s24, 1
      %p99 = por %p97, %p98
      %p101 = scmp.ne.s32.totalorder %s84, %s100
      %p102 = scmp.eq.s32.totalorder %s24, 0
      %p103 = por %p101, %p102
      %p104 = scmp.le.s32.totalorder 1, %s18
      %p105 = scmp.lt.s32.totalorder %s18, 3
      %p106 = pnand %p104, %p105
      %p107 = pneg %p106
      // Predicated region
      $region9: #{tpu_custom_call.1} parent=5 // pred_check
        _
      $region10: #{tpu_custom_call.1} parent=5 // pred_check_branch
        %109 = sbr.rel (%p106) target = $region12
      $region11: #{tpu_custom_call.1} parent=5 // pred_region
        %s110 = ssub.s32 %s18, 1
      $region12: #{tpu_custom_call.1} parent=5 // pred_fallthru
        _
      %p111 = scmp.lt.s32.totalorder %s18, 2
      // Predicated region
      $region13: #{tpu_custom_call.1} parent=5 // pred_check
        %p112 = pneg %p111
      $region14: #{tpu_custom_call.1} parent=5 // pred_check_branch
        %114 = sbr.rel (%p112) target = $region16
      $region15: #{tpu_custom_call.1} parent=5 // pred_region
        // Predicated region
        $region17: #{tpu_custom_call.1} parent=15 // pred_check
          %p115 = pneg %p38
        $region18: #{tpu_custom_call.1} parent=15 // pred_check_branch
          %117 = sbr.rel (%p115) target = $region20
        $region19: #{tpu_custom_call.1} parent=15 // pred_region
          %s118 = sand.u32 %s28, 1
          %s119 = scalar_lea.sflag [#allocation3], %s118
          %s120 = sand.u32 %s28, 1
          %s121 = smul.addr %s120, 64
          %s122 = scalar_lea.vmem [#allocation2], %s121
          %124 = vsyncadd %s119, 0
          %s125 = smul.addr %s18, 8
          %s126 = smul.addr %s125, 8
          %s127 = scalar_lea.hbm %s0, %s126
          %s128 = sshll.u32 %s127, 4
          %s129 = int_to_ptr.hbm [resolvable:$true] %s128
          %s130 = sshll.u32 %s122, 4
          %s131 = int_to_ptr.vmem [resolvable:$true] %s130
          %136 = dma.hbm_to_vmem [thread:$0]  %s129, 1024, %s131, %s119, 256, 256, 16
        $region20: #{tpu_custom_call.1} parent=15 // pred_fallthru
          _
      $region16: #{tpu_custom_call.1} parent=5 // pred_fallthru
        _
      %p137 = scmp.le.s32.totalorder 1, %s18
      %p138 = scmp.lt.s32.totalorder %s18, 3
      %p139 = pnand %p137, %p138
      %p140 = pneg %p139
      // Predicated region
      $region21: #{tpu_custom_call.1} parent=5 // pred_check
        _
      $region22: #{tpu_custom_call.1} parent=5 // pred_check_branch
        %142 = sbr.rel (%p139) target = $region24
      $region23: #{tpu_custom_call.1} parent=5 // pred_region
        %s143 = ssub.s32 %s18, 1
        %s144 = sand.u32 %s31, 1
        %s145 = scalar_lea.sflag [#allocation3], %s144
        %s146 = sand.u32 %s31, 1
        %s147 = smul.addr %s146, 64
        %s148 = scalar_lea.vmem [#allocation2], %s147
        // Predicated region
        $region25: #{tpu_custom_call.1} parent=23 // pred_check
          %p149 = pneg %p44
        $region26: #{tpu_custom_call.1} parent=23 // pred_check_branch
          %151 = sbr.rel (%p149) target = $region28
        $region27: #{tpu_custom_call.1} parent=23 // pred_region
          %153 = dma.done %s145, 1024
        $region28: #{tpu_custom_call.1} parent=23 // pred_fallthru
          _
        %s154 = sand.u32 %s31, 1
        %s155 = scalar_lea.sflag [#allocation3], %s154
        %s156 = sand.u32 %s31, 1
        %s157 = smul.addr %s156, 64
        %s158 = scalar_lea.vmem [#allocation2], %s157
        %p159 = pneg %p44
        %p160 = pneg %p41
        %p161 = pneg %p70
        %p162 = pneg %p67
        %s163 = sand.u32 %s57, 1
        %s164 = scalar_lea.sflag [#allocation4], %s163
        %s165 = sand.u32 %s57, 1
        %s166 = smul.addr %s165, 32
        %s167 = scalar_lea.vmem [#allocation5], %s166
        %p168 = pneg %p96
        %p169 = pneg %p93
        %s170 = sand.u32 %s83, 1
        %s171 = scalar_lea.sflag [#allocation7], %s170
        %s172 = sand.u32 %s83, 1
        %s173 = smul.addr %s172, 32
        %s174 = scalar_lea.vmem [#allocation6], %s173
        %v175 = vld [vmem:[%s148] sm:$0xff]
        %v176 = vld [vmem:[%s148 + $0x8] sm:$0xff]
        %177 = vst [vmem:[%s167] sm:$0xff] %v175
        %178 = vst [vmem:[%s167 + $0x8] sm:$0xff] %v176
        %v179 = vld [vmem:[%s148 + $0x20] sm:$0xff]
        %v180 = vld [vmem:[%s148 + $0x28] sm:$0xff]
        %181 = vst [vmem:[%s167 + $0x10] sm:$0xff] %v179
        %182 = vst [vmem:[%s167 + $0x18] sm:$0xff] %v180
        %v183 = vld [vmem:[%s148 + $0x10] sm:$0xff]
        %v184 = vld [vmem:[%s148 + $0x18] sm:$0xff]
        %185 = vst [vmem:[%s174] sm:$0xff] %v183
        %186 = vst [vmem:[%s174 + $0x8] sm:$0xff] %v184
        %v187 = vld [vmem:[%s148 + $0x30] sm:$0xff]
        %v188 = vld [vmem:[%s148 + $0x38] sm:$0xff]
        %189 = vst [vmem:[%s174 + $0x10] sm:$0xff] %v187
        %190 = vst [vmem:[%s174 + $0x18] sm:$0xff] %v188
        %s191 = sand.u32 %s57, 1
        %s192 = scalar_lea.sflag [#allocation4], %s191
        %s193 = sand.u32 %s57, 1
        %s194 = smul.addr %s193, 32
        %s195 = scalar_lea.vmem [#allocation5], %s194
        %s196 = sand.u32 %s83, 1
        %s197 = scalar_lea.sflag [#allocation7], %s196
        %s198 = sand.u32 %s83, 1
        %s199 = smul.addr %s198, 32
        %s200 = scalar_lea.vmem [#allocation6], %s199
        // Predicated region
        $region29: #{tpu_custom_call.1} parent=23 // pred_check
          %p201 = pneg %p67
        $region30: #{tpu_custom_call.1} parent=23 // pred_check_branch
          %203 = sbr.rel (%p201) target = $region32
        $region31: #{tpu_custom_call.1} parent=23 // pred_region
          %205 = vsyncadd %s192, 0
          %s206 = smul.addr %s23, 4
          %s207 = smul.addr %s206, 8
          %s208 = scalar_lea.hbm %s1, %s207
          %s210 = sshll.u32 %s195, 4
          %s211 = int_to_ptr.vmem [resolvable:$true] %s210
          %s212 = sshll.u32 %s208, 4
          %s213 = int_to_ptr.hbm [resolvable:$true] %s212
          %215 = dma.vmem_to_hbm [thread:$0]  %s211, 512, %s213, %s192
        $region32: #{tpu_custom_call.1} parent=23 // pred_fallthru
          _
        // Predicated region
        $region33: #{tpu_custom_call.1} parent=23 // pred_check
          %p216 = pneg %p93
        $region34: #{tpu_custom_call.1} parent=23 // pred_check_branch
          %218 = sbr.rel (%p216) target = $region36
        $region35: #{tpu_custom_call.1} parent=23 // pred_region
          %220 = vsyncadd %s197, 0
          %s221 = smul.addr %s23, 4
          %s222 = smul.addr %s221, 8
          %s223 = scalar_lea.hbm %s2, %s222
          %s225 = sshll.u32 %s200, 4
          %s226 = int_to_ptr.vmem [resolvable:$true] %s225
          %s227 = sshll.u32 %s223, 4
          %s228 = int_to_ptr.hbm [resolvable:$true] %s227
          %230 = dma.vmem_to_hbm [thread:$0]  %s226, 512, %s228, %s197
        $region36: #{tpu_custom_call.1} parent=23 // pred_fallthru
          _
      $region24: #{tpu_custom_call.1} parent=5 // pred_fallthru
        _
      %p231 = scmp.le.s32.totalorder 2, %s18
      // Predicated region
      $region37: #{tpu_custom_call.1} parent=5 // pred_check
        %p232 = pneg %p231
      $region38: #{tpu_custom_call.1} parent=5 // pred_check_branch
        %234 = sbr.rel (%p232) target = $region40
      $region39: #{tpu_custom_call.1} parent=5 // pred_region
        %s235 = ssub.s32 %s18, 2
        // Predicated region
        $region41: #{tpu_custom_call.1} parent=39 // pred_check
          %p236 = pneg %p73
        $region42: #{tpu_custom_call.1} parent=39 // pred_check_branch
          %238 = sbr.rel (%p236) target = $region44
        $region43: #{tpu_custom_call.1} parent=39 // pred_region
          %s239 = sand.u32 %s58, 1
          %s240 = scalar_lea.sflag [#allocation4], %s239
          %s241 = sand.u32 %s58, 1
          %s242 = smul.addr %s241, 32
          %s243 = scalar_lea.vmem [#allocation5], %s242
          %245 = dma.done %s240, 512
        $region44: #{tpu_custom_call.1} parent=39 // pred_fallthru
          _
        // Predicated region
        $region45: #{tpu_custom_call.1} parent=39 // pred_check
          %p246 = pneg %p99
        $region46: #{tpu_custom_call.1} parent=39 // pred_check_branch
          %248 = sbr.rel (%p246) target = $region48
        $region47: #{tpu_custom_call.1} parent=39 // pred_region
          %s249 = sand.u32 %s84, 1
          %s250 = scalar_lea.sflag [#allocation7], %s249
          %s251 = sand.u32 %s84, 1
          %s252 = smul.addr %s251, 32
          %s253 = scalar_lea.vmem [#allocation6], %s252
          %255 = dma.done %s250, 512
        $region48: #{tpu_custom_call.1} parent=39 // pred_fallthru
          _
      $region40: #{tpu_custom_call.1} parent=5 // pred_fallthru
        _
    $region6: #{tpu_custom_call.1} parent=1 // loop_footer
      %s22 = sadd.s32 1, %s18
    $region7: #{tpu_custom_call.1} parent=1 // loop_footer_branch
      %17 = sbr.rel target = $region3
    $region8: #{tpu_custom_call.1} parent=1 // loop_exit
      _
    %256 = vsyncpa [#allocation3], 1
    %s257 = scalar_lea.sflag [#allocation3], 1
    %258 = vsyncpa %s257, 1
    %259 = vsyncpa [#allocation4], 1
    %s260 = scalar_lea.sflag [#allocation4], 1
    %261 = vsyncpa %s260, 1
    %262 = vsyncpa [#allocation7], 1
    %s263 = scalar_lea.sflag [#allocation7], 1
    %264 = vsyncpa %s263, 1

</llo_original>
